<compile_context>
chip_gen: v7x
topology: tpu7x:2x2x1
jax: 0.10.0
libtpu: 0.0.40
codegen_flags: <defaults>
</compile_context>

<pallas_src>
import jax
import jax.numpy as jnp
from jax.experimental import pallas as pl
from jax.experimental.pallas import tpu as pltpu

NEG_FILL = -1000000000000.0  # same constant as the PyTorch masked_fill
LANE = 128


def _round_up(x, m):
    return ((x + m - 1) // m) * m


# ---------------------------------------------------------------------------
# Pallas kernel 1: batched self-attention
#   fused qkv projection + masked softmax (query-row mask) + attn @ V
#   all outputs lane-dense (width padded to a multiple of 128)
# ---------------------------------------------------------------------------
def _self_attn_kernel(x_ref,       # (Bb, N, C)
                      mask_ref,    # (Bb, N, 1) f32; 1.0 => masked query row
                      wqkv_ref,    # (C, 3*Wp)  [q | k | v], zero pad columns
                      bqkv_ref,    # (1, 3*Wp)
                      o_ref):      # (Bb, N, Wp)
    Bb, N, C = x_ref.shape
    Wp = o_ref.shape[-1]

    # Fused projection: one (Bb*N, C) x (C, 3*Wp) MXU matmul.
    x2 = x_ref[...].reshape(Bb * N, C)
    qkv = jnp.dot(x2, wqkv_ref[...], preferred_element_type=jnp.float32)
    qkv = qkv + bqkv_ref[...]
    q = qkv[:, 0 * Wp:1 * Wp].reshape(Bb, N, Wp)
    k = qkv[:, 1 * Wp:2 * Wp].reshape(Bb, N, Wp)
    v = qkv[:, 2 * Wp:3 * Wp].reshape(Bb, N, Wp)

    # scores = q @ k^T per batch (pad columns of q/k are exactly zero).
    scores = jnp.einsum('bnc,bmc->bnm', q, k,
                        preferred_element_type=jnp.float32)          # (Bb,N,N)

    # masked_softmax: entire query rows >= valid_len get -1e12
    # (matches torch masked_fill-then-softmax; fully masked rows -> uniform).
    scores = jnp.where(mask_ref[...] > 0.5, NEG_FILL, scores)

    scores = scores - jnp.max(scores, axis=-1, keepdims=True)
    p = jnp.exp(scores)
    denom = jnp.sum(p, axis=-1, keepdims=True)
    p = p * pl.reciprocal(denom, approx=True)                        # EUP slot

    out = jnp.einsum('bnm,bmw->bnw', p.astype(v.dtype), v,
                     preferred_element_type=jnp.float32)             # (Bb,N,Wp)
    o_ref[...] = out.astype(o_ref.dtype)


def _pick_batch_block(B, N, Wp, vmem_budget_bytes=4 << 20):
    """Largest Bb dividing B whose f32 working set fits a modest VMEM budget."""
    per_batch = 4 * (N * N + 6 * N * Wp)   # scores + qkv/q/k/v/out (f32)
    bb = max(1, min(B, vmem_budget_bytes // max(per_batch, 1)))
    while B % bb:
        bb -= 1
    return bb


def self_attn_pallas(x, row_mask, wqkv, bqkv):
    """x: (B, N, C); row_mask: (B, N, 1); wqkv: (C, 3*Wp); bqkv: (1, 3*Wp).
    Returns (B, N, Wp) with Wp a multiple of 128 (pad columns are zero)."""
    B, N, C = x.shape
    Wp = wqkv.shape[1] // 3
    Bb = _pick_batch_block(B, N, Wp)
    grid = (B // Bb,)

    flops = 2 * B * N * C * 3 * Wp + 2 * 2 * B * N * N * Wp
    bytes_accessed = 4 * (B * N * C + C * 3 * Wp + 3 * Wp + B * N + B * N * Wp)

    return pl.pallas_call(
        _self_attn_kernel,
        out_shape=jax.ShapeDtypeStruct((B, N, Wp), x.dtype),
        grid=grid,
        in_specs=[
            pl.BlockSpec((Bb, N, C), lambda bi: (bi, 0, 0)),
            pl.BlockSpec((Bb, N, 1), lambda bi: (bi, 0, 0)),
            pl.BlockSpec((C, 3 * Wp), lambda bi: (0, 0)),
            pl.BlockSpec((1, 3 * Wp), lambda bi: (0, 0)),
        ],
        out_specs=pl.BlockSpec((Bb, N, Wp), lambda bi: (bi, 0, 0)),
        compiler_params=pltpu.CompilerParams(
            dimension_semantics=("parallel",)),
        cost_estimate=pl.CostEstimate(
            flops=flops, transcendentals=B * N * N,
            bytes_accessed=bytes_accessed),
    )(x, row_mask, wqkv, bqkv)


# ---------------------------------------------------------------------------
# Pallas kernel 2: MessagePassing(aggr='add') as a tiled dense adjacency matmul
#   out[i] = sum_{e: dst[e]==i} h[src[e]]  ==  adj @ h
# ---------------------------------------------------------------------------
def _aggregate_kernel(adj_ref, x_ref, o_ref, acc_ref):
    @pl.when(pl.program_id(2) == 0)
    def _():
        acc_ref[...] = jnp.zeros_like(acc_ref)

    acc_ref[...] += jnp.dot(adj_ref[...].astype(jnp.float32), x_ref[...],
                            preferred_element_type=jnp.float32)

    @pl.when(pl.program_id(2) == pl.num_programs(2) - 1)
    def _():
        o_ref[...] = acc_ref[...].astype(o_ref.dtype)


def aggregate_pallas(adj, x2d, *, tm=128, tn=128, tk=128):
    """adj: (Ntp, Ntp) bf16 dense adjacency (dst x src); x2d: (Ntp, Wp) f32."""
    Ntp = adj.shape[0]
    Wp = x2d.shape[1]
    assert Ntp % tm == 0 and Ntp % tk == 0 and Wp % tn == 0

    flops = 2 * Ntp * Ntp * Wp
    bytes_accessed = adj.size * adj.dtype.itemsize + 2 * 4 * Ntp * Wp

    return pl.pallas_call(
        _aggregate_kernel,
        out_shape=jax.ShapeDtypeStruct((Ntp, Wp), x2d.dtype),
        grid=(Ntp // tm, Wp // tn, Ntp // tk),
        in_specs=[
            pl.BlockSpec((tm, tk), lambda i, j, k: (i, k)),
            pl.BlockSpec((tk, tn), lambda i, j, k: (k, j)),
        ],
        out_specs=pl.BlockSpec((tm, tn), lambda i, j, k: (i, j)),
        scratch_shapes=[pltpu.VMEM((tm, tn), jnp.float32)],
        compiler_params=pltpu.CompilerParams(
            dimension_semantics=("parallel", "parallel", "arbitrary")),
        cost_estimate=pl.CostEstimate(
            flops=flops, transcendentals=0, bytes_accessed=bytes_accessed),
    )(adj, x2d)


# ---------------------------------------------------------------------------
# GlobalGraph wrapper (glue in plain JAX)
# ---------------------------------------------------------------------------
def init_global_graph_params(key, in_chs, global_graph_width, num_global_layers=1):
    """Deterministic init mirroring nn.Linear default (uniform +-1/sqrt(fan_in))."""
    params = []
    c = in_chs
    for _ in range(num_global_layers):
        layer = []
        for _ in range(3):  # q, k, v
            key, kw, kb = jax.random.split(key, 3)
            bound = 1.0 / jnp.sqrt(jnp.float32(c))
            w = jax.random.uniform(kw, (c, global_graph_width), jnp.float32,
                                   minval=-bound, maxval=bound)
            b = jax.random.uniform(kb, (1, global_graph_width), jnp.float32,
                                   minval=-bound, maxval=bound)
            layer += [w, b]
        params.append(tuple(layer))
        c = global_graph_width
    return params


def _fuse_qkv(wq, bq, wk, bk, wv, bv, Wp):
    """Concatenate q/k/v into one (C, 3*Wp) weight / (1, 3*Wp) bias, padding
    the output width to Wp (lane-dense); pad columns are zero."""
    W = wq.shape[1]
    pad = Wp - W
    ws = [jnp.pad(w, ((0, 0), (0, pad))) for w in (wq, wk, wv)]
    bs = [jnp.pad(b, ((0, 0), (0, pad))) for b in (bq, bk, bv)]
    return jnp.concatenate(ws, axis=1), jnp.concatenate(bs, axis=1)


def global_graph_forward(params, x, edge_index, valid_lens, time_step_len=None):
    """x: (B, N, in_chs); edge_index: (2, E) over B*N flattened nodes.
    Returns (B*N, global_graph_width), matching the PyTorch module."""
    del time_step_len  # read but unused by the compute path in the reference module
    B, N, _ = x.shape
    Nt = B * N
    W = params[0][0].shape[1]
    Wp = _round_up(max(W, LANE), LANE)        # lane-dense padded width
    Ntp = _round_up(Nt, LANE)                 # padded node count for tiling

    # ---- hoisted, layer-invariant pieces -------------------------------
    # query-row mask: 1.0 where row index >= valid_len[b] (fully masked row)
    if valid_lens is None:
        row_mask = jnp.zeros((B, N, 1), jnp.float32)
    else:
        row_mask = (jnp.arange(N, dtype=jnp.int32)[None, :]
                    >= valid_lens[:, None]).astype(jnp.float32)[..., None]
    # dense adjacency for aggr='add'; bf16 is exact for small integer counts.
    # TODO(synk): for very large / sparse graphs, replace the dense adjacency
    # with a scalar-prefetch edge-list gather-accumulate kernel.
    src, dst = edge_index[0], edge_index[1]
    adj = (jnp.zeros((Ntp, Ntp), jnp.float32)
           .at[dst, src].add(1.0)
           .astype(jnp.bfloat16))

    h = x
    out2d = None
    for (wq, bq, wk, bk, wv, bv) in params:
        wqkv, bqkv = _fuse_qkv(wq, bq, wk, bk, wv, bv, Wp)
        h3 = self_attn_pallas(h, row_mask, wqkv, bqkv)            # (B, N, Wp)
        x2d = h3.reshape(Nt, Wp)
        if Ntp != Nt:
            x2d = jnp.pad(x2d, ((0, Ntp - Nt), (0, 0)))
        agg = aggregate_pallas(adj, x2d)                           # (Ntp, Wp)
        out2d = agg[:Nt, :W]                                       # (B*N, W)
        h = out2d.reshape(B, N, W)
    return out2d


# ---------------------------------------------------------------------------
# Pure-JAX reference (for correctness check only)
# ---------------------------------------------------------------------------
def _reference_forward(params, x, edge_index, valid_lens):
    B, N, _ = x.shape
    h = x
    out2d = None
    for (wq, bq, wk, bk, wv, bv) in params:
        q = h @ wq + bq
        k = h @ wk + bk
        v = h @ wv + bv
        scores = jnp.einsum('bnc,bmc->bnm', q, k)
        rows = jnp.arange(N)[None, :, None]
        mask = rows >= valid_lens[:, None, None]
        scores = jnp.where(mask, NEG_FILL, scores)
        p = jax.nn.softmax(scores, axis=-1)
        o = jnp.einsum('bnm,bmw->bnw', p, v)
        W = wq.shape[1]
        x2d = o.reshape(-1, W)
        Nt = x2d.shape[0]
        src, dst = edge_index[0], edge_index[1]
        out2d = jax.ops.segment_sum(x2d[src], dst, num_segments=Nt)
        h = out2d.reshape(B, N, W)
    return out2d


if __name__ == "__main__":
    B, N, IN_CHS, WIDTH = 2, 8, 16, 32
    key = jax.random.PRNGKey(0)
    k_x, k_e, k_p = jax.random.split(key, 3)

    x = jax.random.normal(k_x, (B, N, IN_CHS), jnp.float32)
    valid_lens = jnp.array([5, 8], dtype=jnp.int32)          # per-batch valid node count
    E = 24
    edge_index = jax.random.randint(k_e, (2, E), 0, B * N, dtype=jnp.int32)
    time_step_len = N

    params = init_global_graph_params(k_p, IN_CHS, WIDTH, num_global_layers=1)

    fwd = jax.jit(global_graph_forward)
    out = fwd(params, x, edge_index, valid_lens, time_step_len)
    out = jax.block_until_ready(out)

    ref = _reference_forward(params, x, edge_index, valid_lens)
    assert out.shape == (B * N, WIDTH)
    # tolerance looser than f32 eps because the kernel uses the EUP
    # approximate reciprocal for the softmax normalization.
    assert jnp.allclose(out, ref, atol=5e-3, rtol=5e-3), "mismatch vs reference"

    print("KERNEL_OK")
</pallas_src>

<mosaic_0001>
module attributes {stable_mosaic.version = 11 : i64} {
  func.func @_self_attn_kernel(%arg0: i32, %arg1: memref<2x8x16xf32, #tpu.memory_space<vmem>>, %arg2: memref<2x8x1xf32, #tpu.memory_space<vmem>>, %arg3: memref<16x384xf32, #tpu.memory_space<vmem>>, %arg4: memref<1x384xf32, #tpu.memory_space<vmem>>, %arg5: memref<2x8x128xf32, #tpu.memory_space<vmem>>) attributes {dimension_semantics = [#tpu.dimension_semantics<parallel>], iteration_bounds = array<i64: 1>, scalar_prefetch = 0 : i64, scratch_operands = 0 : i64, tpu.core_type = #tpu.core_type<tc>, window_params = [{transform_indices = @transform_0, window_bounds = array<i64: 2, 8, 16>}, {transform_indices = @transform_1, window_bounds = array<i64: 2, 8, 1>}, {pipeline_mode = #tpu.pipeline_mode<synchronous>, transform_indices = @transform_2, window_bounds = array<i64: 16, 384>}, {pipeline_mode = #tpu.pipeline_mode<synchronous>, transform_indices = @transform_3, window_bounds = array<i64: 1, 384>}, {transform_indices = @transform_4, window_bounds = array<i64: 2, 8, 128>}]} {
    %c0 = arith.constant 0 : index
    %c0_0 = arith.constant 0 : index
    %c0_1 = arith.constant 0 : index
    %0 = vector.load %arg1[%c0, %c0_0, %c0_1] : memref<2x8x16xf32, #tpu.memory_space<vmem>>, vector<2x8x16xf32>
    %1 = vector.shape_cast %0 : vector<2x8x16xf32> to vector<16x16xf32>
    %c0_2 = arith.constant 0 : index
    %c0_3 = arith.constant 0 : index
    %2 = vector.load %arg3[%c0_2, %c0_3] : memref<16x384xf32, #tpu.memory_space<vmem>>, vector<16x384xf32>
    %cst = arith.constant dense<0.000000e+00> : vector<16x384xf32>
    %3 = tpu.matmul %1, %2, %cst {dimension_numbers = #tpu.dot_dimension_numbers<[1], [0], [0], [1], [0, 0, 1, 1], [], []>} : vector<16x16xf32>, vector<16x384xf32>, vector<16x384xf32> -> vector<16x384xf32>
    %c0_4 = arith.constant 0 : index
    %c0_5 = arith.constant 0 : index
    %4 = vector.load %arg4[%c0_4, %c0_5] : memref<1x384xf32, #tpu.memory_space<vmem>>, vector<1x384xf32>
    %5 = vector.broadcast %4 : vector<1x384xf32> to vector<16x384xf32>
    %6 = arith.addf %3, %5 : vector<16x384xf32>
    %7 = vector.extract_strided_slice %6 {offsets = [0, 0], sizes = [16, 128], strides = [1, 1]} : vector<16x384xf32> to vector<16x128xf32>
    %8 = vector.shape_cast %7 : vector<16x128xf32> to vector<2x8x128xf32>
    %9 = vector.extract_strided_slice %6 {offsets = [0, 128], sizes = [16, 128], strides = [1, 1]} : vector<16x384xf32> to vector<16x128xf32>
    %10 = vector.shape_cast %9 : vector<16x128xf32> to vector<2x8x128xf32>
    %11 = vector.extract_strided_slice %6 {offsets = [0, 256], sizes = [16, 128], strides = [1, 1]} : vector<16x384xf32> to vector<16x128xf32>
    %12 = vector.shape_cast %11 : vector<16x128xf32> to vector<2x8x128xf32>
    "tpu.trace_start"() <{level = 10 : i32, message = "bnc,bmc->bnm"}> : () -> ()
    %cst_6 = arith.constant dense<0.000000e+00> : vector<2x8x8xf32>
    %13 = tpu.matmul %8, %10, %cst_6 {dimension_numbers = #tpu.dot_dimension_numbers<[2], [2], [1], [1], [0, 0, 0, 1, 1, 1], [0], [0]>} : vector<2x8x128xf32>, vector<2x8x128xf32>, vector<2x8x8xf32> -> vector<2x8x8xf32>
    "tpu.trace_stop"() : () -> ()
    %c0_7 = arith.constant 0 : index
    %c0_8 = arith.constant 0 : index
    %c0_9 = arith.constant 0 : index
    %14 = vector.load %arg2[%c0_7, %c0_8, %c0_9] : memref<2x8x1xf32, #tpu.memory_space<vmem>>, vector<2x8x1xf32>
    %cst_10 = arith.constant 5.000000e-01 : f32
    %15 = vector.broadcast %cst_10 : f32 to vector<2x8x1xf32>
    %16 = arith.cmpf ogt, %14, %15 : vector<2x8x1xf32>
    %cst_11 = arith.constant -9.99999995E+11 : f32
    %17 = vector.shape_cast %16 : vector<2x8x1xi1> to vector<2x8x1xi1>
    %18 = vector.broadcast %17 : vector<2x8x1xi1> to vector<2x8x8xi1>
    %19 = vector.broadcast %cst_11 : f32 to vector<2x8x8xf32>
    %20 = arith.select %18, %19, %13 : vector<2x8x8xi1>, vector<2x8x8xf32>
    %cst_12 = arith.constant dense<0xFF800000> : vector<2x8xf32>
    %21 = vector.multi_reduction <maximumf>, %20, %cst_12 [2] : vector<2x8x8xf32> to vector<2x8xf32>
    %22 = vector.shape_cast %21 : vector<2x8xf32> to vector<2x8x1xf32>
    %23 = vector.broadcast %22 : vector<2x8x1xf32> to vector<2x8x8xf32>
    %24 = arith.subf %20, %23 : vector<2x8x8xf32>
    %25 = math.exp %24 : vector<2x8x8xf32>
    %cst_13 = arith.constant dense<0.000000e+00> : vector<2x8xf32>
    %26 = vector.multi_reduction <add>, %25, %cst_13 [2] : vector<2x8x8xf32> to vector<2x8xf32>
    %27 = vector.shape_cast %26 : vector<2x8xf32> to vector<2x8x1xf32>
    %28 = tpu.reciprocal %27 {approx = true} : vector<2x8x1xf32> -> vector<2x8x1xf32>
    %29 = vector.broadcast %28 : vector<2x8x1xf32> to vector<2x8x8xf32>
    %30 = arith.mulf %25, %29 : vector<2x8x8xf32>
    "tpu.trace_start"() <{level = 10 : i32, message = "bnm,bmw->bnw"}> : () -> ()
    %cst_14 = arith.constant dense<0.000000e+00> : vector<2x8x128xf32>
    %31 = tpu.matmul %30, %12, %cst_14 {dimension_numbers = #tpu.dot_dimension_numbers<[2], [1], [1], [2], [0, 0, 0, 1, 1, 2], [0], [0]>} : vector<2x8x8xf32>, vector<2x8x128xf32>, vector<2x8x128xf32> -> vector<2x8x128xf32>
    "tpu.trace_stop"() : () -> ()
    %c0_15 = arith.constant 0 : index
    %c0_16 = arith.constant 0 : index
    %c0_17 = arith.constant 0 : index
    %32 = vector.load %arg5[%c0_15, %c0_16, %c0_17] : memref<2x8x128xf32, #tpu.memory_space<vmem>>, vector<2x8x128xf32>
    tpu.vector_store %arg5[%c0_15, %c0_16, %c0_17], %31 {strides = array<i32>} : memref<2x8x128xf32, #tpu.memory_space<vmem>>, vector<2x8x128xf32>,
    return
  }
  func.func @transform_0(%arg0: i32) -> (i32, i32, i32) {
    %c0_i32 = arith.constant 0 : i32
    %c0_i32_0 = arith.constant 0 : i32
    %c0_i32_1 = arith.constant 0 : i32
    return %arg0, %c0_i32, %c0_i32_0 : i32, i32, i32
  }
  func.func @transform_1(%arg0: i32) -> (i32, i32, i32) {
    %c0_i32 = arith.constant 0 : i32
    %c0_i32_0 = arith.constant 0 : i32
    %c0_i32_1 = arith.constant 0 : i32
    return %arg0, %c0_i32, %c0_i32_0 : i32, i32, i32
  }
  func.func @transform_2(%arg0: i32) -> (i32, i32) {
    %c0_i32 = arith.constant 0 : i32
    %c0_i32_0 = arith.constant 0 : i32
    %c0_i32_1 = arith.constant 0 : i32
    return %c0_i32, %c0_i32_0 : i32, i32
  }
  func.func @transform_3(%arg0: i32) -> (i32, i32) {
    %c0_i32 = arith.constant 0 : i32
    %c0_i32_0 = arith.constant 0 : i32
    %c0_i32_1 = arith.constant 0 : i32
    return %c0_i32, %c0_i32_0 : i32, i32
  }
  func.func @transform_4(%arg0: i32) -> (i32, i32, i32) {
    %c0_i32 = arith.constant 0 : i32
    %c0_i32_0 = arith.constant 0 : i32
    %c0_i32_1 = arith.constant 0 : i32
    return %arg0, %c0_i32, %c0_i32_0 : i32, i32, i32
  }
}

module attributes {stable_mosaic.version = 11 : i64} {
  func.func @_aggregate_kernel(%arg0: i32, %arg1: i32, %arg2: i32, %arg3: memref<128x128xbf16, #tpu.memory_space<vmem>>, %arg4: memref<128x128xf32, #tpu.memory_space<vmem>>, %arg5: memref<128x128xf32, #tpu.memory_space<vmem>>, %arg6: memref<128x128xf32, #tpu.memory_space<vmem>>) attributes {dimension_semantics = [#tpu.dimension_semantics<parallel>, #tpu.dimension_semantics<parallel>, #tpu.dimension_semantics<arbitrary>], iteration_bounds = array<i64: 1, 1, 1>, scalar_prefetch = 0 : i64, scratch_operands = 1 : i64, tpu.core_type = #tpu.core_type<tc>, window_params = [{transform_indices = @transform_0, window_bounds = array<i64: 128, 128>}, {transform_indices = @transform_1, window_bounds = array<i64: 128, 128>}, {transform_indices = @transform_2, window_bounds = array<i64: 128, 128>}]} {
    %c0_i32 = arith.constant 0 : i32
    %0 = arith.cmpi eq, %arg2, %c0_i32 : i32
    %1 = arith.extui %0 : i1 to i32
    %c0_i32_0 = arith.constant 0 : i32
    %2 = arith.cmpi ne, %1, %c0_i32_0 : i32
    scf.if %2 {
      %cst_10 = arith.constant 0.000000e+00 : f32
      %13 = vector.broadcast %cst_10 : f32 to vector<128x128xf32>
      %c0_11 = arith.constant 0 : index
      %c0_12 = arith.constant 0 : index
      %14 = vector.load %arg6[%c0_11, %c0_12] : memref<128x128xf32, #tpu.memory_space<vmem>>, vector<128x128xf32>
      tpu.vector_store %arg6[%c0_11, %c0_12], %13 {strides = array<i32>} : memref<128x128xf32, #tpu.memory_space<vmem>>, vector<128x128xf32>,
    } else {
    }
    %c0 = arith.constant 0 : index
    %c0_1 = arith.constant 0 : index
    %3 = vector.load %arg6[%c0, %c0_1] : memref<128x128xf32, #tpu.memory_space<vmem>>, vector<128x128xf32>
    %c0_2 = arith.constant 0 : index
    %c0_3 = arith.constant 0 : index
    %4 = vector.load %arg3[%c0_2, %c0_3] : memref<128x128xbf16, #tpu.memory_space<vmem>>, vector<128x128xbf16>
    %5 = arith.extf %4 : vector<128x128xbf16> to vector<128x128xf32>
    %c0_4 = arith.constant 0 : index
    %c0_5 = arith.constant 0 : index
    %6 = vector.load %arg4[%c0_4, %c0_5] : memref<128x128xf32, #tpu.memory_space<vmem>>, vector<128x128xf32>
    %cst = arith.constant dense<0.000000e+00> : vector<128x128xf32>
    %7 = tpu.matmul %5, %6, %cst {dimension_numbers = #tpu.dot_dimension_numbers<[1], [0], [0], [1], [0, 0, 1, 1], [], []>} : vector<128x128xf32>, vector<128x128xf32>, vector<128x128xf32> -> vector<128x128xf32>
    %8 = arith.addf %3, %7 : vector<128x128xf32>
    %c0_6 = arith.constant 0 : index
    %c0_7 = arith.constant 0 : index
    %9 = vector.load %arg6[%c0_6, %c0_7] : memref<128x128xf32, #tpu.memory_space<vmem>>, vector<128x128xf32>
    tpu.vector_store %arg6[%c0_6, %c0_7], %8 {strides = array<i32>} : memref<128x128xf32, #tpu.memory_space<vmem>>, vector<128x128xf32>,
    %c0_i32_8 = arith.constant 0 : i32
    %10 = arith.cmpi eq, %arg2, %c0_i32_8 : i32
    %11 = arith.extui %10 : i1 to i32
    %c0_i32_9 = arith.constant 0 : i32
    %12 = arith.cmpi ne, %11, %c0_i32_9 : i32
    scf.if %12 {
      %c0_10 = arith.constant 0 : index
      %c0_11 = arith.constant 0 : index
      %13 = vector.load %arg6[%c0_10, %c0_11] : memref<128x128xf32, #tpu.memory_space<vmem>>, vector<128x128xf32>
      %c0_12 = arith.constant 0 : index
      %c0_13 = arith.constant 0 : index
      %14 = vector.load %arg5[%c0_12, %c0_13] : memref<128x128xf32, #tpu.memory_space<vmem>>, vector<128x128xf32>
      tpu.vector_store %arg5[%c0_12, %c0_13], %13 {strides = array<i32>} : memref<128x128xf32, #tpu.memory_space<vmem>>, vector<128x128xf32>,
    } else {
    }
    return
  }
  func.func @transform_0(%arg0: i32, %arg1: i32, %arg2: i32) -> (i32, i32) {
    %c0_i32 = arith.constant 0 : i32
    return %arg0, %arg2 : i32, i32
  }
  func.func @transform_1(%arg0: i32, %arg1: i32, %arg2: i32) -> (i32, i32) {
    %c0_i32 = arith.constant 0 : i32
    return %arg2, %arg1 : i32, i32
  }
  func.func @transform_2(%arg0: i32, %arg1: i32, %arg2: i32) -> (i32, i32) {
    %c0_i32 = arith.constant 0 : i32
    return %arg0, %arg1 : i32, i32
  }
}

</mosaic_0001>

<llo_original>
// kernel: global_graph_forward.2
$region0: #{global_graph_forward.2}
  #allocation0 [shape = 'u32[]', space=smem, size = 0x4, offset = 0x4, fixed_abs, tag = 'smem constant byte address 0x4 - core index']
  #allocation1 [shape = 'u32[144,128]{1,0:T(1,128)}', space=vmem, size = 0x12000, scoped, tag = 'internal scratch']
  %s0 = inlined_call_operand.vmem [shape: f32[2,8,16], index: 0, kind: input, shape index: {}]
  %s1 = inlined_call_operand.vmem [shape: f32[2,8,1], index: 1, kind: input, shape index: {}]
  %s2 = inlined_call_operand.vmem [shape: f32[16,384], index: 2, kind: input, shape index: {}]
  %s3 = inlined_call_operand.vmem [shape: f32[1,384], index: 3, kind: input, shape index: {}]
  %s4 = inlined_call_operand.vmem [shape: f32[2,8,128], index: 4, kind: output, shape index: {}]
  %s5 = sld [smem:[#allocation0]]
  $region26: #{global_graph_forward.2} parent=0
    _
  %s7 = ssub.s32 1, %s5
  %s8 = scalar_select 0, %s7, %s5
  // Predicated region
  $region2: #{global_graph_forward.2} parent=0 // pred_check
    _
  $region3: #{global_graph_forward.2} parent=0 // pred_check_branch
    %10 = sbr.rel (0) target = $region5
  $region4: #{global_graph_forward.2} parent=0 // pred_region
    _
  $region5: #{global_graph_forward.2} parent=0 // pred_fallthru
    _
  // Predicated region
  $region6: #{global_graph_forward.2} parent=0 // pred_check
    _
  $region7: #{global_graph_forward.2} parent=0 // pred_check_branch
    %12 = sbr.rel (0) target = $region9
  $region8: #{global_graph_forward.2} parent=0 // pred_region
    _
  $region9: #{global_graph_forward.2} parent=0 // pred_fallthru
    _
  // Predicated region
  $region10: #{global_graph_forward.2} parent=0 // pred_check
    _
  $region11: #{global_graph_forward.2} parent=0 // pred_check_branch
    %14 = sbr.rel (0) target = $region13
  $region12: #{global_graph_forward.2} parent=0 // pred_region
    _
  $region13: #{global_graph_forward.2} parent=0 // pred_fallthru
    _
  // Predicated region
  $region14: #{global_graph_forward.2} parent=0 // pred_check
    _
  $region15: #{global_graph_forward.2} parent=0 // pred_check_branch
    %16 = sbr.rel (0) target = $region17
  $region16: #{global_graph_forward.2} parent=0 // pred_region
    _
  $region17: #{global_graph_forward.2} parent=0 // pred_fallthru
    _
  %v17 = vld [vmem:[%s0] sm:$0xff]
  %v18 = vld [vmem:[%s0 + $0x8] sm:$0xff]
  %v19 = vld [vmem:[%s2] sm:$0xff]
  %v20 = vld [vmem:[%s2 + $0x8] sm:$0xff]
  %v21 = vld [vmem:[%s2 + $0x10] sm:$0xff]
  %v22 = vld [vmem:[%s2 + $0x18] sm:$0xff]
  %v23 = vld [vmem:[%s2 + $0x20] sm:$0xff]
  %v24 = vld [vmem:[%s2 + $0x28] sm:$0xff]
  %v25 = vld [vmem:[%s3] sm:$0x7]
  %v27 = vlaneseq
  %v28 = vshrl.u32 %v27, 7
  %v29 = vsub.s32 0, %v28
  %v30 = vrot.slane %v25, %v29
  %v31 = vlaneseq
  %v32 = vshrl.u32 %v31, 7
  %v33 = vsub.s32 1, %v32
  %v34 = vrot.slane %v25, %v33
  %v35 = vlaneseq
  %v36 = vshrl.u32 %v35, 7
  %v37 = vsub.s32 2, %v36
  %v38 = vrot.slane %v25, %v37
  %vm42 = vcmask 130048
  %v44 = vsel %vm42, %v17, 0
  %v47 = vsel %vm42, %v18, 0
  %49 = vmatprep.subr.mxu0 %v20
  %50 = vmatpush1.msra.mxu0 %v19
  %51 = vmatprep.subr.mxu0 %v23
  %52 = vmatpush1.msra.mxu0 %v22
  %53 = vmatprep.subr.mxu0 0.0
  %54 = vmatpush1.msra.mxu0 0.0
  %55 = vmatprep.subr.mxu0 0.0
  %56 = vmatpush1.msra.mxu0 0.0
  %57 = vmatprep.subr.mxu0 0.0
  %58 = vmatpush1.msra.mxu0 0.0
  %59 = vmatprep.subr.mxu0 0.0
  %60 = vmatpush1.msra.mxu0 0.0
  %61 = vmatprep.subr.mxu0 0.0
  %62 = vmatpush1.msra.mxu0 0.0
  %63 = vmatprep.subr.mxu0 0.0
  %64 = vmatpush1.msra.mxu0 0.0
  %65 = vmatprep.subr.mxu0 0.0
  %66 = vmatpush1.msra.mxu0 0.0
  %67 = vmatprep.subr.mxu0 0.0
  %68 = vmatpush1.msra.mxu0 0.0
  %69 = vmatprep.subr.mxu0 0.0
  %70 = vmatpush1.msra.mxu0 0.0
  %71 = vmatprep.subr.mxu0 0.0
  %72 = vmatpush1.msra.mxu0 0.0
  %73 = vmatprep.subr.mxu0 0.0
  %74 = vmatpush1.msra.mxu0 0.0
  %75 = vmatprep.subr.mxu0 0.0
  %76 = vmatpush1.msra.mxu0 0.0
  %77 = vmatprep.subr.mxu0 0.0
  %78 = vmatpush1.msra.mxu0 0.0
  %79 = vmatprep.subr.mxu0 0.0
  %80 = vmatpush1.msra.mxu0 0.0
  %81 = vmatprep.subr.mxu0 0.0
  %82 = vmatpush1.msra.mxu0 0.0
  %83 = vmatprep.subr.mxu0 0.0
  %84 = vmatpush1.msra.mxu0 0.0
  %85 = vmatprep.subr.mxu0 0.0
  %86 = vmatpush1.msra.mxu0 0.0
  %87 = vmatprep.subr.mxu0 0.0
  %88 = vmatpush1.msra.mxu0 0.0
  %89 = vmatprep.subr.mxu0 0.0
  %90 = vmatpush1.msra.mxu0 0.0
  %91 = vmatprep.subr.mxu0 0.0
  %92 = vmatpush1.msra.mxu0 0.0
  %93 = vmatprep.subr.mxu0 0.0
  %94 = vmatpush1.msra.mxu0 0.0
  %95 = vmatprep.subr.mxu0 0.0
  %96 = vmatpush1.msra.mxu0 0.0
  %97 = vmatprep.subr.mxu0 0.0
  %98 = vmatpush1.msra.mxu0 0.0
  %99 = vmatprep.subr.mxu0 0.0
  %100 = vmatpush1.msra.mxu0 0.0
  %101 = vmatprep.subr.mxu0 0.0
  %102 = vmatpush1.msra.mxu0 0.0
  %103 = vmatprep.subr.mxu0 0.0
  %104 = vmatpush1.msra.mxu0 0.0
  %105 = vmatprep.subr.mxu0 0.0
  %106 = vmatpush1.msra.mxu0 0.0
  %107 = vmatprep.subr.mxu0 0.0
  %108 = vmatpush1.msra.mxu0 0.0
  %109 = vmatprep.subr.mxu0 0.0
  %110 = vmatpush1.msra.mxu0 0.0
  %111 = vmatprep.subr.mxu0 0.0
  %112 = vmatpush1.msra.mxu0 0.0
  %113 = vmatprep.mubr.f32.mxu0 0.0
  %114 = vmatmul.mubr.f32.gmra.mrb[0].mxu0 %v44
  %v115 = vpop.f32.mrb[0].mxu0
  %v116 = vadd.f32 %v30, %v115
  %v117 = vpop.f32.mrb[0].mxu0
  %v118 = vadd.f32 %v34, %v117
  %119 = vmatprep.mubr.f32.mxu0 0.0
  %120 = vmatmul.mubr.f32.gmra.mrb[0].mxu0 %v47
  %v121 = vpop.f32.mrb[0].mxu0
  %v122 = vadd.f32 %v30, %v121
  %v123 = vpop.f32.mrb[0].mxu0
  %v124 = vadd.f32 %v34, %v123
  %125 = vdwg.mxu0
  %126 = vmatprep.subr.mxu0 0.0
  %127 = vmatpush1.msra.mxu0 %v21
  %128 = vmatprep.subr.mxu0 0.0
  %129 = vmatpush1.msra.mxu0 %v24
  %130 = vmatprep.subr.mxu0 0.0
  %131 = vmatpush1.msra.mxu0 0.0
  %132 = vmatprep.subr.mxu0 0.0
  %133 = vmatpush1.msra.mxu0 0.0
  %134 = vmatprep.subr.mxu0 0.0
  %135 = vmatpush1.msra.mxu0 0.0
  %136 = vmatprep.subr.mxu0 0.0
  %137 = vmatpush1.msra.mxu0 0.0
  %138 = vmatprep.subr.mxu0 0.0
  %139 = vmatpush1.msra.mxu0 0.0
  %140 = vmatprep.subr.mxu0 0.0
  %141 = vmatpush1.msra.mxu0 0.0
  %142 = vmatprep.subr.mxu0 0.0
  %143 = vmatpush1.msra.mxu0 0.0
  %144 = vmatprep.subr.mxu0 0.0
  %145 = vmatpush1.msra.mxu0 0.0
  %146 = vmatprep.subr.mxu0 0.0
  %147 = vmatpush1.msra.mxu0 0.0
  %148 = vmatprep.subr.mxu0 0.0
  %149 = vmatpush1.msra.mxu0 0.0
  %150 = vmatprep.subr.mxu0 0.0
  %151 = vmatpush1.msra.mxu0 0.0
  %152 = vmatprep.subr.mxu0 0.0
  %153 = vmatpush1.msra.mxu0 0.0
  %154 = vmatprep.subr.mxu0 0.0
  %155 = vmatpush1.msra.mxu0 0.0
  %156 = vmatprep.subr.mxu0 0.0
  %157 = vmatpush1.msra.mxu0 0.0
  %158 = vmatprep.subr.mxu0 0.0
  %159 = vmatpush1.msra.mxu0 0.0
  %160 = vmatprep.subr.mxu0 0.0
  %161 = vmatpush1.msra.mxu0 0.0
  %162 = vmatprep.subr.mxu0 0.0
  %163 = vmatpush1.msra.mxu0 0.0
  %164 = vmatprep.subr.mxu0 0.0
  %165 = vmatpush1.msra.mxu0 0.0
  %166 = vmatprep.subr.mxu0 0.0
  %167 = vmatpush1.msra.mxu0 0.0
  %168 = vmatprep.subr.mxu0 0.0
  %169 = vmatpush1.msra.mxu0 0.0
  %170 = vmatprep.subr.mxu0 0.0
  %171 = vmatpush1.msra.mxu0 0.0
  %172 = vmatprep.subr.mxu0 0.0
  %173 = vmatpush1.msra.mxu0 0.0
  %174 = vmatprep.subr.mxu0 0.0
  %175 = vmatpush1.msra.mxu0 0.0
  %176 = vmatprep.subr.mxu0 0.0
  %177 = vmatpush1.msra.mxu0 0.0
  %178 = vmatprep.subr.mxu0 0.0
  %179 = vmatpush1.msra.mxu0 0.0
  %180 = vmatprep.subr.mxu0 0.0
  %181 = vmatpush1.msra.mxu0 0.0
  %182 = vmatprep.subr.mxu0 0.0
  %183 = vmatpush1.msra.mxu0 0.0
  %184 = vmatprep.subr.mxu0 0.0
  %185 = vmatpush1.msra.mxu0 0.0
  %186 = vmatprep.subr.mxu0 0.0
  %187 = vmatpush1.msra.mxu0 0.0
  %188 = vmatprep.subr.mxu0 0.0
  %189 = vmatpush1.msra.mxu0 0.0
  %190 = vmatprep.mubr.f32.mxu0 0.0
  %191 = vmatmul.mubr.f32.gmra.mrb[0].mxu0 %v44
  %v192 = vpop.f32.mrb[0].mxu0
  %v193 = vadd.f32 %v38, %v192
  %v194 = vpop.f32.mrb[0].mxu0
  %195 = vmatprep.mubr.f32.mxu0 0.0
  %196 = vmatmul.mubr.f32.gmra.mrb[0].mxu0 %v47
  %v197 = vpop.f32.mrb[0].mxu0
  %v198 = vadd.f32 %v38, %v197
  %v199 = vpop.f32.mrb[0].mxu0
  %200 = vdwg.mxu0
  %201 = vmatprep.subr.mxu0 0.0
  %202 = vmatpush1.xpose.msra.mxu0 %v118
  %203 = vmatprep.subr.mxu0 0.0
  %204 = vmatpush1.xpose.msra.mxu0 0.0
  %205 = vmatprep.subr.mxu0 0.0
  %206 = vmatpush1.xpose.msra.mxu0 0.0
  %207 = vmatprep.subr.mxu0 0.0
  %208 = vmatpush1.xpose.msra.mxu0 0.0
  %209 = vmatprep.subr.mxu0 0.0
  %210 = vmatpush1.xpose.msra.mxu0 0.0
  %211 = vmatprep.subr.mxu0 0.0
  %212 = vmatpush1.xpose.msra.mxu0 0.0
  %213 = vmatprep.subr.mxu0 0.0
  %214 = vmatpush1.xpose.msra.mxu0 0.0
  %215 = vmatprep.subr.mxu0 0.0
  %216 = vmatpush1.xpose.msra.mxu0 0.0
  %217 = vmatprep.subr.mxu0 0.0
  %218 = vmatpush1.xpose.msra.mxu0 0.0
  %219 = vmatprep.subr.mxu0 0.0
  %220 = vmatpush1.xpose.msra.mxu0 0.0
  %221 = vmatprep.subr.mxu0 0.0
  %222 = vmatpush1.xpose.msra.mxu0 0.0
  %223 = vmatprep.subr.mxu0 0.0
  %224 = vmatpush1.xpose.msra.mxu0 0.0
  %225 = vmatprep.subr.mxu0 0.0
  %226 = vmatpush1.xpose.msra.mxu0 0.0
  %227 = vmatprep.subr.mxu0 0.0
  %228 = vmatpush1.xpose.msra.mxu0 0.0
  %229 = vmatprep.subr.mxu0 0.0
  %230 = vmatpush1.xpose.msra.mxu0 0.0
  %231 = vmatprep.subr.mxu0 0.0
  %232 = vmatpush1.xpose.msra.mxu0 0.0
  %233 = vmatprep.subr.mxu0 0.0
  %234 = vmatpush1.xpose.msra.mxu0 0.0
  %235 = vmatprep.subr.mxu0 0.0
  %236 = vmatpush1.xpose.msra.mxu0 0.0
  %237 = vmatprep.subr.mxu0 0.0
  %238 = vmatpush1.xpose.msra.mxu0 0.0
  %239 = vmatprep.subr.mxu0 0.0
  %240 = vmatpush1.xpose.msra.mxu0 0.0
  %241 = vmatprep.subr.mxu0 0.0
  %242 = vmatpush1.xpose.msra.mxu0 0.0
  %243 = vmatprep.subr.mxu0 0.0
  %244 = vmatpush1.xpose.msra.mxu0 0.0
  %245 = vmatprep.subr.mxu0 0.0
  %246 = vmatpush1.xpose.msra.mxu0 0.0
  %247 = vmatprep.subr.mxu0 0.0
  %248 = vmatpush1.xpose.msra.mxu0 0.0
  %249 = vmatprep.subr.mxu0 0.0
  %250 = vmatpush1.xpose.msra.mxu0 0.0
  %251 = vmatprep.subr.mxu0 0.0
  %252 = vmatpush1.xpose.msra.mxu0 0.0
  %253 = vmatprep.subr.mxu0 0.0
  %254 = vmatpush1.xpose.msra.mxu0 0.0
  %255 = vmatprep.subr.mxu0 0.0
  %256 = vmatpush1.xpose.msra.mxu0 0.0
  %257 = vmatprep.subr.mxu0 0.0
  %258 = vmatpush1.xpose.msra.mxu0 0.0
  %259 = vmatprep.subr.mxu0 0.0
  %260 = vmatpush1.xpose.msra.mxu0 0.0
  %261 = vmatprep.subr.mxu0 0.0
  %262 = vmatpush1.xpose.msra.mxu0 0.0
  %263 = vmatprep.subr.mxu0 0.0
  %264 = vmatpush1.xpose.msra.mxu0 0.0
  %265 = vmatprep.mubr.f32.mxu0 0.0
  %266 = vmatmul.mubr.f32.gmra.mrb[0].mxu0 %v116
  %v267 = vpop.f32.mrb[0].mxu0
  %v268 = vadd.f32 0.0, %v267
  %v269 = vpop.f32.mrb[0].mxu0
  %270 = vdwg.mxu0
  %271 = vmatprep.subr.mxu0 0.0
  %272 = vmatpush1.xpose.msra.mxu0 %v124
  %273 = vmatprep.subr.mxu0 0.0
  %274 = vmatpush1.xpose.msra.mxu0 0.0
  %275 = vmatprep.subr.mxu0 0.0
  %276 = vmatpush1.xpose.msra.mxu0 0.0
  %277 = vmatprep.subr.mxu0 0.0
  %278 = vmatpush1.xpose.msra.mxu0 0.0
  %279 = vmatprep.subr.mxu0 0.0
  %280 = vmatpush1.xpose.msra.mxu0 0.0
  %281 = vmatprep.subr.mxu0 0.0
  %282 = vmatpush1.xpose.msra.mxu0 0.0
  %283 = vmatprep.subr.mxu0 0.0
  %284 = vmatpush1.xpose.msra.mxu0 0.0
  %285 = vmatprep.subr.mxu0 0.0
  %286 = vmatpush1.xpose.msra.mxu0 0.0
  %287 = vmatprep.subr.mxu0 0.0
  %288 = vmatpush1.xpose.msra.mxu0 0.0
  %289 = vmatprep.subr.mxu0 0.0
  %290 = vmatpush1.xpose.msra.mxu0 0.0
  %291 = vmatprep.subr.mxu0 0.0
  %292 = vmatpush1.xpose.msra.mxu0 0.0
  %293 = vmatprep.subr.mxu0 0.0
  %294 = vmatpush1.xpose.msra.mxu0 0.0
  %295 = vmatprep.subr.mxu0 0.0
  %296 = vmatpush1.xpose.msra.mxu0 0.0
  %297 = vmatprep.subr.mxu0 0.0
  %298 = vmatpush1.xpose.msra.mxu0 0.0
  %299 = vmatprep.subr.mxu0 0.0
  %300 = vmatpush1.xpose.msra.mxu0 0.0
  %301 = vmatprep.subr.mxu0 0.0
  %302 = vmatpush1.xpose.msra.mxu0 0.0
  %303 = vmatprep.subr.mxu0 0.0
  %304 = vmatpush1.xpose.msra.mxu0 0.0
  %305 = vmatprep.subr.mxu0 0.0
  %306 = vmatpush1.xpose.msra.mxu0 0.0
  %307 = vmatprep.subr.mxu0 0.0
  %308 = vmatpush1.xpose.msra.mxu0 0.0
  %309 = vmatprep.subr.mxu0 0.0
  %310 = vmatpush1.xpose.msra.mxu0 0.0
  %311 = vmatprep.subr.mxu0 0.0
  %312 = vmatpush1.xpose.msra.mxu0 0.0
  %313 = vmatprep.subr.mxu0 0.0
  %314 = vmatpush1.xpose.msra.mxu0 0.0
  %315 = vmatprep.subr.mxu0 0.0
  %316 = vmatpush1.xpose.msra.mxu0 0.0
  %317 = vmatprep.subr.mxu0 0.0
  %318 = vmatpush1.xpose.msra.mxu0 0.0
  %319 = vmatprep.subr.mxu0 0.0
  %320 = vmatpush1.xpose.msra.mxu0 0.0
  %321 = vmatprep.subr.mxu0 0.0
  %322 = vmatpush1.xpose.msra.mxu0 0.0
  %323 = vmatprep.subr.mxu0 0.0
  %324 = vmatpush1.xpose.msra.mxu0 0.0
  %325 = vmatprep.subr.mxu0 0.0
  %326 = vmatpush1.xpose.msra.mxu0 0.0
  %327 = vmatprep.subr.mxu0 0.0
  %328 = vmatpush1.xpose.msra.mxu0 0.0
  %329 = vmatprep.subr.mxu0 0.0
  %330 = vmatpush1.xpose.msra.mxu0 0.0
  %331 = vmatprep.subr.mxu0 0.0
  %332 = vmatpush1.xpose.msra.mxu0 0.0
  %333 = vmatprep.subr.mxu0 0.0
  %334 = vmatpush1.xpose.msra.mxu0 0.0
  %335 = vmatprep.mubr.f32.mxu0 0.0
  %336 = vmatmul.mubr.f32.gmra.mrb[0].mxu0 %v122
  %v337 = vpop.f32.mrb[0].mxu0
  %v338 = vadd.f32 0.0, %v337
  %v339 = vpop.f32.mrb[0].mxu0
  %340 = vdwg.mxu0
  %v341 = vld [vmem:[%s1] sm:$0xff]
  %v342 = vld [vmem:[%s1 + $0x8] sm:$0xff]
  %vm343 = vcmp.gt.f32.partialorder %v341, 0.5
  %vm344 = vcmp.gt.f32.partialorder %v342, 0.5
  %v345 = vsel %vm343, 1, 0
  %v346 = vsel %vm344, 1, 0
  %347 = vset.pattern.permute.xlu0 0
  %348 = vperm.xlu0 %347, %v345
  %v349 = vpop.permute.xlu0 %348
  %350 = vset.pattern.permute.xlu0 0
  %351 = vperm.xlu0 %350, %v346
  %v352 = vpop.permute.xlu0 %351
  %vm353 = vcmp.eq.s32.totalorder %v349, 1
  %vm354 = vcmp.eq.s32.totalorder %v352, 1
  %v355 = vsel %vm353, -1e+12, %v268
  %v356 = vsel %vm354, -1e+12, %v338
  %vm357 = vcmask 64512
  %v358 = vsel %vm357, %v355, -inf
  %359 = vmax.xlane.f32.xlu0 %v358
  %v360 = vpop.xlane.xlu0 %359
  %v361 = vsel %vm357, %v356, -inf
  %362 = vmax.xlane.f32.xlu0 %v361
  %v363 = vpop.xlane.xlu0 %362
  %v364 = vsub.f32 %v355, %v360
  %v365 = vsub.f32 %v356, %v363
  %v366 = vmul.f32 %v364, 1.442695
  %v367 = vpow.pop %v366
  %v368 = vmul.f32 %v365, 1.442695
  %v369 = vpow.pop %v368
  %v370 = vsel %vm357, %v367, 0.0
  %371 = vadd.xlane.f32.xlu0 %v370
  %v372 = vpop.xlane.xlu0 %371
  %v373 = vsel %vm357, %v369, 0.0
  %374 = vadd.xlane.f32.xlu0 %v373
  %v375 = vpop.xlane.xlu0 %374
  %v376 = vrcp.pop %v372
  %v377 = vrcp.pop %v375
  %v378 = vmul.f32 %v367, %v376
  %v379 = vmul.f32 %v369, %v377
  %v381 = vsel %vm357, %v378, 0
  %383 = vmatprep.subr.mxu0 0.0
  %384 = vmatpush1.msra.mxu0 %v193
  %385 = vmatprep.subr.mxu0 0.0
  %386 = vmatpush1.msra.mxu0 0.0
  %387 = vmatprep.subr.mxu0 0.0
  %388 = vmatpush1.msra.mxu0 0.0
  %389 = vmatprep.subr.mxu0 0.0
  %390 = vmatpush1.msra.mxu0 0.0
  %391 = vmatprep.subr.mxu0 0.0
  %392 = vmatpush1.msra.mxu0 0.0
  %393 = vmatprep.subr.mxu0 0.0
  %394 = vmatpush1.msra.mxu0 0.0
  %395 = vmatprep.subr.mxu0 0.0
  %396 = vmatpush1.msra.mxu0 0.0
  %397 = vmatprep.subr.mxu0 0.0
  %398 = vmatpush1.msra.mxu0 0.0
  %399 = vmatprep.subr.mxu0 0.0
  %400 = vmatpush1.msra.mxu0 0.0
  %401 = vmatprep.subr.mxu0 0.0
  %402 = vmatpush1.msra.mxu0 0.0
  %403 = vmatprep.subr.mxu0 0.0
  %404 = vmatpush1.msra.mxu0 0.0
  %405 = vmatprep.subr.mxu0 0.0
  %406 = vmatpush1.msra.mxu0 0.0
  %407 = vmatprep.subr.mxu0 0.0
  %408 = vmatpush1.msra.mxu0 0.0
  %409 = vmatprep.subr.mxu0 0.0
  %410 = vmatpush1.msra.mxu0 0.0
  %411 = vmatprep.subr.mxu0 0.0
  %412 = vmatpush1.msra.mxu0 0.0
  %413 = vmatprep.subr.mxu0 0.0
  %414 = vmatpush1.msra.mxu0 0.0
  %415 = vmatprep.subr.mxu0 0.0
  %416 = vmatpush1.msra.mxu0 0.0
  %417 = vmatprep.subr.mxu0 0.0
  %418 = vmatpush1.msra.mxu0 0.0
  %419 = vmatprep.subr.mxu0 0.0
  %420 = vmatpush1.msra.mxu0 0.0
  %421 = vmatprep.subr.mxu0 0.0
  %422 = vmatpush1.msra.mxu0 0.0
  %423 = vmatprep.subr.mxu0 0.0
  %424 = vmatpush1.msra.mxu0 0.0
  %425 = vmatprep.subr.mxu0 0.0
  %426 = vmatpush1.msra.mxu0 0.0
  %427 = vmatprep.subr.mxu0 0.0
  %428 = vmatpush1.msra.mxu0 0.0
  %429 = vmatprep.subr.mxu0 0.0
  %430 = vmatpush1.msra.mxu0 0.0
  %431 = vmatprep.subr.mxu0 0.0
  %432 = vmatpush1.msra.mxu0 0.0
  %433 = vmatprep.subr.mxu0 0.0
  %434 = vmatpush1.msra.mxu0 0.0
  %435 = vmatprep.subr.mxu0 0.0
  %436 = vmatpush1.msra.mxu0 0.0
  %437 = vmatprep.subr.mxu0 0.0
  %438 = vmatpush1.msra.mxu0 0.0
  %439 = vmatprep.subr.mxu0 0.0
  %440 = vmatpush1.msra.mxu0 0.0
  %441 = vmatprep.subr.mxu0 0.0
  %442 = vmatpush1.msra.mxu0 0.0
  %443 = vmatprep.subr.mxu0 0.0
  %444 = vmatpush1.msra.mxu0 0.0
  %445 = vmatprep.subr.mxu0 0.0
  %446 = vmatpush1.msra.mxu0 0.0
  %447 = vmatprep.mubr.f32.mxu0 0.0
  %448 = vmatmul.mubr.f32.gmra.mrb[0].mxu0 %v381
  %v449 = vpop.f32.mrb[0].mxu0
  %v450 = vadd.f32 0.0, %v449
  %v451 = vpop.f32.mrb[0].mxu0
  %452 = vdwg.mxu0
  %v454 = vsel %vm357, %v379, 0
  %456 = vmatprep.subr.mxu0 0.0
  %457 = vmatpush1.msra.mxu0 %v198
  %458 = vmatprep.subr.mxu0 0.0
  %459 = vmatpush1.msra.mxu0 0.0
  %460 = vmatprep.subr.mxu0 0.0
  %461 = vmatpush1.msra.mxu0 0.0
  %462 = vmatprep.subr.mxu0 0.0
  %463 = vmatpush1.msra.mxu0 0.0
  %464 = vmatprep.subr.mxu0 0.0
  %465 = vmatpush1.msra.mxu0 0.0
  %466 = vmatprep.subr.mxu0 0.0
  %467 = vmatpush1.msra.mxu0 0.0
  %468 = vmatprep.subr.mxu0 0.0
  %469 = vmatpush1.msra.mxu0 0.0
  %470 = vmatprep.subr.mxu0 0.0
  %471 = vmatpush1.msra.mxu0 0.0
  %472 = vmatprep.subr.mxu0 0.0
  %473 = vmatpush1.msra.mxu0 0.0
  %474 = vmatprep.subr.mxu0 0.0
  %475 = vmatpush1.msra.mxu0 0.0
  %476 = vmatprep.subr.mxu0 0.0
  %477 = vmatpush1.msra.mxu0 0.0
  %478 = vmatprep.subr.mxu0 0.0
  %479 = vmatpush1.msra.mxu0 0.0
  %480 = vmatprep.subr.mxu0 0.0
  %481 = vmatpush1.msra.mxu0 0.0
  %482 = vmatprep.subr.mxu0 0.0
  %483 = vmatpush1.msra.mxu0 0.0
  %484 = vmatprep.subr.mxu0 0.0
  %485 = vmatpush1.msra.mxu0 0.0
  %486 = vmatprep.subr.mxu0 0.0
  %487 = vmatpush1.msra.mxu0 0.0
  %488 = vmatprep.subr.mxu0 0.0
  %489 = vmatpush1.msra.mxu0 0.0
  %490 = vmatprep.subr.mxu0 0.0
  %491 = vmatpush1.msra.mxu0 0.0
  %492 = vmatprep.subr.mxu0 0.0
  %493 = vmatpush1.msra.mxu0 0.0
  %494 = vmatprep.subr.mxu0 0.0
  %495 = vmatpush1.msra.mxu0 0.0
  %496 = vmatprep.subr.mxu0 0.0
  %497 = vmatpush1.msra.mxu0 0.0
  %498 = vmatprep.subr.mxu0 0.0
  %499 = vmatpush1.msra.mxu0 0.0
  %500 = vmatprep.subr.mxu0 0.0
  %501 = vmatpush1.msra.mxu0 0.0
  %502 = vmatprep.subr.mxu0 0.0
  %503 = vmatpush1.msra.mxu0 0.0
  %504 = vmatprep.subr.mxu0 0.0
  %505 = vmatpush1.msra.mxu0 0.0
  %506 = vmatprep.subr.mxu0 0.0
  %507 = vmatpush1.msra.mxu0 0.0
  %508 = vmatprep.subr.mxu0 0.0
  %509 = vmatpush1.msra.mxu0 0.0
  %510 = vmatprep.subr.mxu0 0.0
  %511 = vmatpush1.msra.mxu0 0.0
  %512 = vmatprep.subr.mxu0 0.0
  %513 = vmatpush1.msra.mxu0 0.0
  %514 = vmatprep.subr.mxu0 0.0
  %515 = vmatpush1.msra.mxu0 0.0
  %516 = vmatprep.subr.mxu0 0.0
  %517 = vmatpush1.msra.mxu0 0.0
  %518 = vmatprep.subr.mxu0 0.0
  %519 = vmatpush1.msra.mxu0 0.0
  %520 = vmatprep.mubr.f32.mxu0 0.0
  %521 = vmatmul.mubr.f32.gmra.mrb[0].mxu0 %v454
  %v522 = vpop.f32.mrb[0].mxu0
  %v523 = vadd.f32 0.0, %v522
  %v524 = vpop.f32.mrb[0].mxu0
  %525 = vdwg.mxu0
  %526 = vst [vmem:[%s4] sm:$0xff] %v450
  %527 = vst [vmem:[%s4 + $0x8] sm:$0xff] %v523
  // Predicated region
  $region18: #{global_graph_forward.2} parent=0 // pred_check
    _
  $region19: #{global_graph_forward.2} parent=0 // pred_check_branch
    %529 = sbr.rel (0) target = $region21
  $region20: #{global_graph_forward.2} parent=0 // pred_region
    _
  $region21: #{global_graph_forward.2} parent=0 // pred_fallthru
    _
  // Predicated region
  $region22: #{global_graph_forward.2} parent=0 // pred_check
    _
  $region23: #{global_graph_forward.2} parent=0 // pred_check_branch
    %531 = sbr.rel (0) target = $region25
  $region24: #{global_graph_forward.2} parent=0 // pred_region
    _
  $region25: #{global_graph_forward.2} parent=0 // pred_fallthru
    _

// kernel: global_graph_forward.3
$region0: #{global_graph_forward.3}
  #allocation0 [shape = 'u32[]', space=smem, size = 0x4, offset = 0x4, fixed_abs, tag = 'smem constant byte address 0x4 - core index']
  #allocation1 [shape = 'u32[144,128]{1,0:T(1,128)}', space=vmem, size = 0x12000, scoped, tag = 'internal scratch']
  #allocation2 [shape = 'f32[128,128]{1,0:T(8,128)}', space=vmem, size = 0x10000, scoped, tag = 'scratch operand']
  %s0 = inlined_call_operand.vmem [shape: bf16[128,128], index: 0, kind: input, shape index: {}]
  %s1 = inlined_call_operand.vmem [shape: f32[128,128], index: 1, kind: input, shape index: {}]
  %s2 = inlined_call_operand.vmem [shape: f32[128,128], index: 2, kind: output, shape index: {}]
  %s3 = sld [smem:[#allocation0]]
  $region26: #{global_graph_forward.3} parent=0
    _
  %s5 = ssub.s32 1, %s3
  %s6 = scalar_select 0, %s5, %s3
  // Predicated region
  $region2: #{global_graph_forward.3} parent=0 // pred_check
    _
  $region3: #{global_graph_forward.3} parent=0 // pred_check_branch
    %8 = sbr.rel (0) target = $region5
  $region4: #{global_graph_forward.3} parent=0 // pred_region
    _
  $region5: #{global_graph_forward.3} parent=0 // pred_fallthru
    _
  // Predicated region
  $region6: #{global_graph_forward.3} parent=0 // pred_check
    _
  $region7: #{global_graph_forward.3} parent=0 // pred_check_branch
    %10 = sbr.rel (0) target = $region9
  $region8: #{global_graph_forward.3} parent=0 // pred_region
    _
  $region9: #{global_graph_forward.3} parent=0 // pred_fallthru
    _
  %p11 = scmp.eq.s32.totalorder 0, 0
  // Predicated region
  $region10: #{global_graph_forward.3} parent=0 // pred_check
    %p12 = pneg %p11
  $region11: #{global_graph_forward.3} parent=0 // pred_check_branch
    %14 = sbr.rel (%p12) target = $region13
  $region12: #{global_graph_forward.3} parent=0 // pred_region
    %15 = vst [vmem:[#allocation2] sm:$0xff] 0.0
    %16 = vst [vmem:[#allocation2 + $0x8] sm:$0xff] 0.0
    %17 = vst [vmem:[#allocation2 + $0x10] sm:$0xff] 0.0
    %18 = vst [vmem:[#allocation2 + $0x18] sm:$0xff] 0.0
    %19 = vst [vmem:[#allocation2 + $0x20] sm:$0xff] 0.0
    %20 = vst [vmem:[#allocation2 + $0x28] sm:$0xff] 0.0
    %21 = vst [vmem:[#allocation2 + $0x30] sm:$0xff] 0.0
    %22 = vst [vmem:[#allocation2 + $0x38] sm:$0xff] 0.0
    %23 = vst [vmem:[#allocation2 + $0x40] sm:$0xff] 0.0
    %24 = vst [vmem:[#allocation2 + $0x48] sm:$0xff] 0.0
    %25 = vst [vmem:[#allocation2 + $0x50] sm:$0xff] 0.0
    %26 = vst [vmem:[#allocation2 + $0x58] sm:$0xff] 0.0
    %27 = vst [vmem:[#allocation2 + $0x60] sm:$0xff] 0.0
    %28 = vst [vmem:[#allocation2 + $0x68] sm:$0xff] 0.0
    %29 = vst [vmem:[#allocation2 + $0x70] sm:$0xff] 0.0
    %30 = vst [vmem:[#allocation2 + $0x78] sm:$0xff] 0.0
  $region13: #{global_graph_forward.3} parent=0 // pred_fallthru
    _
  %v31 = vld [vmem:[#allocation2] sm:$0xff]
  %v32 = vld [vmem:[#allocation2 + $0x8] sm:$0xff]
  %v33 = vld [vmem:[#allocation2 + $0x10] sm:$0xff]
  %v34 = vld [vmem:[#allocation2 + $0x18] sm:$0xff]
  %v35 = vld [vmem:[#allocation2 + $0x20] sm:$0xff]
  %v36 = vld [vmem:[#allocation2 + $0x28] sm:$0xff]
  %v37 = vld [vmem:[#allocation2 + $0x30] sm:$0xff]
  %v38 = vld [vmem:[#allocation2 + $0x38] sm:$0xff]
  %v39 = vld [vmem:[#allocation2 + $0x40] sm:$0xff]
  %v40 = vld [vmem:[#allocation2 + $0x48] sm:$0xff]
  %v41 = vld [vmem:[#allocation2 + $0x50] sm:$0xff]
  %v42 = vld [vmem:[#allocation2 + $0x58] sm:$0xff]
  %v43 = vld [vmem:[#allocation2 + $0x60] sm:$0xff]
  %v44 = vld [vmem:[#allocation2 + $0x68] sm:$0xff]
  %v45 = vld [vmem:[#allocation2 + $0x70] sm:$0xff]
  %v46 = vld [vmem:[#allocation2 + $0x78] sm:$0xff]
  %v47 = vld [vmem:[%s0] sm:$0xf]
  %v48 = vld [vmem:[%s0 + $0x4] sm:$0xf]
  %v49 = vld [vmem:[%s0 + $0x8] sm:$0xf]
  %v50 = vld [vmem:[%s0 + $0xc] sm:$0xf]
  %v51 = vld [vmem:[%s0 + $0x10] sm:$0xf]
  %v52 = vld [vmem:[%s0 + $0x14] sm:$0xf]
  %v53 = vld [vmem:[%s0 + $0x18] sm:$0xf]
  %v54 = vld [vmem:[%s0 + $0x1c] sm:$0xf]
  %v55 = vld [vmem:[%s0 + $0x20] sm:$0xf]
  %v56 = vld [vmem:[%s0 + $0x24] sm:$0xf]
  %v57 = vld [vmem:[%s0 + $0x28] sm:$0xf]
  %v58 = vld [vmem:[%s0 + $0x2c] sm:$0xf]
  %v59 = vld [vmem:[%s0 + $0x30] sm:$0xf]
  %v60 = vld [vmem:[%s0 + $0x34] sm:$0xf]
  %v61 = vld [vmem:[%s0 + $0x38] sm:$0xf]
  %v62 = vld [vmem:[%s0 + $0x3c] sm:$0xf]
  %v63 = vunpack.c.l.bf16 %v47
  %v64 = vunpack.c.l.bf16 %v48
  %v65 = vunpack.c.l.bf16 %v49
  %v66 = vunpack.c.l.bf16 %v50
  %v67 = vunpack.c.l.bf16 %v51
  %v68 = vunpack.c.l.bf16 %v52
  %v69 = vunpack.c.l.bf16 %v53
  %v70 = vunpack.c.l.bf16 %v54
  %v71 = vunpack.c.l.bf16 %v55
  %v72 = vunpack.c.l.bf16 %v56
  %v73 = vunpack.c.l.bf16 %v57
  %v74 = vunpack.c.l.bf16 %v58
  %v75 = vunpack.c.l.bf16 %v59
  %v76 = vunpack.c.l.bf16 %v60
  %v77 = vunpack.c.l.bf16 %v61
  %v78 = vunpack.c.l.bf16 %v62
  %v79 = vld [vmem:[%s1] sm:$0xff]
  %v80 = vld [vmem:[%s1 + $0x8] sm:$0xff]
  %v81 = vld [vmem:[%s1 + $0x10] sm:$0xff]
  %v82 = vld [vmem:[%s1 + $0x18] sm:$0xff]
  %v83 = vld [vmem:[%s1 + $0x20] sm:$0xff]
  %v84 = vld [vmem:[%s1 + $0x28] sm:$0xff]
  %v85 = vld [vmem:[%s1 + $0x30] sm:$0xff]
  %v86 = vld [vmem:[%s1 + $0x38] sm:$0xff]
  %v87 = vld [vmem:[%s1 + $0x40] sm:$0xff]
  %v88 = vld [vmem:[%s1 + $0x48] sm:$0xff]
  %v89 = vld [vmem:[%s1 + $0x50] sm:$0xff]
  %v90 = vld [vmem:[%s1 + $0x58] sm:$0xff]
  %v91 = vld [vmem:[%s1 + $0x60] sm:$0xff]
  %v92 = vld [vmem:[%s1 + $0x68] sm:$0xff]
  %v93 = vld [vmem:[%s1 + $0x70] sm:$0xff]
  %v94 = vld [vmem:[%s1 + $0x78] sm:$0xff]
  %95 = vmatprep.subr.mxu0 0.0
  %96 = vmatpush1.msra.mxu0 %v79
  %97 = vmatprep.subr.mxu0 0.0
  %98 = vmatpush1.msra.mxu0 %v80
  %99 = vmatprep.subr.mxu0 0.0
  %100 = vmatpush1.msra.mxu0 %v81
  %101 = vmatprep.subr.mxu0 0.0
  %102 = vmatpush1.msra.mxu0 %v82
  %103 = vmatprep.subr.mxu0 0.0
  %104 = vmatpush1.msra.mxu0 %v83
  %105 = vmatprep.subr.mxu0 0.0
  %106 = vmatpush1.msra.mxu0 %v84
  %107 = vmatprep.subr.mxu0 0.0
  %108 = vmatpush1.msra.mxu0 %v85
  %109 = vmatprep.subr.mxu0 0.0
  %110 = vmatpush1.msra.mxu0 %v86
  %111 = vmatprep.subr.mxu0 0.0
  %112 = vmatpush1.msra.mxu0 %v87
  %113 = vmatprep.subr.mxu0 0.0
  %114 = vmatpush1.msra.mxu0 %v88
  %115 = vmatprep.subr.mxu0 0.0
  %116 = vmatpush1.msra.mxu0 %v89
  %117 = vmatprep.subr.mxu0 0.0
  %118 = vmatpush1.msra.mxu0 %v90
  %119 = vmatprep.subr.mxu0 0.0
  %120 = vmatpush1.msra.mxu0 %v91
  %121 = vmatprep.subr.mxu0 0.0
  %122 = vmatpush1.msra.mxu0 %v92
  %123 = vmatprep.subr.mxu0 0.0
  %124 = vmatpush1.msra.mxu0 %v93
  %125 = vmatprep.subr.mxu0 0.0
  %126 = vmatpush1.msra.mxu0 %v94
  %127 = vmatprep.subr.mxu0 0.0
  %128 = vmatpush1.msra.mxu0 0.0
  %129 = vmatprep.subr.mxu0 0.0
  %130 = vmatpush1.msra.mxu0 0.0
  %131 = vmatprep.subr.mxu0 0.0
  %132 = vmatpush1.msra.mxu0 0.0
  %133 = vmatprep.subr.mxu0 0.0
  %134 = vmatpush1.msra.mxu0 0.0
  %135 = vmatprep.subr.mxu0 0.0
  %136 = vmatpush1.msra.mxu0 0.0
  %137 = vmatprep.subr.mxu0 0.0
  %138 = vmatpush1.msra.mxu0 0.0
  %139 = vmatprep.subr.mxu0 0.0
  %140 = vmatpush1.msra.mxu0 0.0
  %141 = vmatprep.subr.mxu0 0.0
  %142 = vmatpush1.msra.mxu0 0.0
  %143 = vmatprep.subr.mxu0 0.0
  %144 = vmatpush1.msra.mxu0 0.0
  %145 = vmatprep.subr.mxu0 0.0
  %146 = vmatpush1.msra.mxu0 0.0
  %147 = vmatprep.subr.mxu0 0.0
  %148 = vmatpush1.msra.mxu0 0.0
  %149 = vmatprep.subr.mxu0 0.0
  %150 = vmatpush1.msra.mxu0 0.0
  %151 = vmatprep.subr.mxu0 0.0
  %152 = vmatpush1.msra.mxu0 0.0
  %153 = vmatprep.subr.mxu0 0.0
  %154 = vmatpush1.msra.mxu0 0.0
  %155 = vmatprep.subr.mxu0 0.0
  %156 = vmatpush1.msra.mxu0 0.0
  %157 = vmatprep.subr.mxu0 0.0
  %158 = vmatpush1.msra.mxu0 0.0
  %159 = vmatprep.mubr.f32.mxu0 0.0
  %160 = vmatmul.mubr.f32.gmra.mrb[0].mxu0 %v63
  %v161 = vpop.f32.mrb[0].mxu0
  %v162 = vadd.f32 0.0, %v161
  %v163 = vpop.f32.mrb[0].mxu0
  %164 = vmatprep.mubr.f32.mxu0 0.0
  %165 = vmatmul.mubr.f32.gmra.mrb[0].mxu0 %v64
  %v166 = vpop.f32.mrb[0].mxu0
  %v167 = vadd.f32 0.0, %v166
  %v168 = vpop.f32.mrb[0].mxu0
  %169 = vmatprep.mubr.f32.mxu0 0.0
  %170 = vmatmul.mubr.f32.gmra.mrb[0].mxu0 %v65
  %v171 = vpop.f32.mrb[0].mxu0
  %v172 = vadd.f32 0.0, %v171
  %v173 = vpop.f32.mrb[0].mxu0
  %174 = vmatprep.mubr.f32.mxu0 0.0
  %175 = vmatmul.mubr.f32.gmra.mrb[0].mxu0 %v66
  %v176 = vpop.f32.mrb[0].mxu0
  %v177 = vadd.f32 0.0, %v176
  %v178 = vpop.f32.mrb[0].mxu0
  %179 = vmatprep.mubr.f32.mxu0 0.0
  %180 = vmatmul.mubr.f32.gmra.mrb[0].mxu0 %v67
  %v181 = vpop.f32.mrb[0].mxu0
  %v182 = vadd.f32 0.0, %v181
  %v183 = vpop.f32.mrb[0].mxu0
  %184 = vmatprep.mubr.f32.mxu0 0.0
  %185 = vmatmul.mubr.f32.gmra.mrb[0].mxu0 %v68
  %v186 = vpop.f32.mrb[0].mxu0
  %v187 = vadd.f32 0.0, %v186
  %v188 = vpop.f32.mrb[0].mxu0
  %189 = vmatprep.mubr.f32.mxu0 0.0
  %190 = vmatmul.mubr.f32.gmra.mrb[0].mxu0 %v69
  %v191 = vpop.f32.mrb[0].mxu0
  %v192 = vadd.f32 0.0, %v191
  %v193 = vpop.f32.mrb[0].mxu0
  %194 = vmatprep.mubr.f32.mxu0 0.0
  %195 = vmatmul.mubr.f32.gmra.mrb[0].mxu0 %v70
  %v196 = vpop.f32.mrb[0].mxu0
  %v197 = vadd.f32 0.0, %v196
  %v198 = vpop.f32.mrb[0].mxu0
  %199 = vmatprep.mubr.f32.mxu0 0.0
  %200 = vmatmul.mubr.f32.gmra.mrb[0].mxu0 %v71
  %v201 = vpop.f32.mrb[0].mxu0
  %v202 = vadd.f32 0.0, %v201
  %v203 = vpop.f32.mrb[0].mxu0
  %204 = vmatprep.mubr.f32.mxu0 0.0
  %205 = vmatmul.mubr.f32.gmra.mrb[0].mxu0 %v72
  %v206 = vpop.f32.mrb[0].mxu0
  %v207 = vadd.f32 0.0, %v206
  %v208 = vpop.f32.mrb[0].mxu0
  %209 = vmatprep.mubr.f32.mxu0 0.0
  %210 = vmatmul.mubr.f32.gmra.mrb[0].mxu0 %v73
  %v211 = vpop.f32.mrb[0].mxu0
  %v212 = vadd.f32 0.0, %v211
  %v213 = vpop.f32.mrb[0].mxu0
  %214 = vmatprep.mubr.f32.mxu0 0.0
  %215 = vmatmul.mubr.f32.gmra.mrb[0].mxu0 %v74
  %v216 = vpop.f32.mrb[0].mxu0
  %v217 = vadd.f32 0.0, %v216
  %v218 = vpop.f32.mrb[0].mxu0
  %219 = vmatprep.mubr.f32.mxu0 0.0
  %220 = vmatmul.mubr.f32.gmra.mrb[0].mxu0 %v75
  %v221 = vpop.f32.mrb[0].mxu0
  %v222 = vadd.f32 0.0, %v221
  %v223 = vpop.f32.mrb[0].mxu0
  %224 = vmatprep.mubr.f32.mxu0 0.0
  %225 = vmatmul.mubr.f32.gmra.mrb[0].mxu0 %v76
  %v226 = vpop.f32.mrb[0].mxu0
  %v227 = vadd.f32 0.0, %v226
  %v228 = vpop.f32.mrb[0].mxu0
  %229 = vmatprep.mubr.f32.mxu0 0.0
  %230 = vmatmul.mubr.f32.gmra.mrb[0].mxu0 %v77
  %v231 = vpop.f32.mrb[0].mxu0
  %v232 = vadd.f32 0.0, %v231
  %v233 = vpop.f32.mrb[0].mxu0
  %234 = vmatprep.mubr.f32.mxu0 0.0
  %235 = vmatmul.mubr.f32.gmra.mrb[0].mxu0 %v78
  %v236 = vpop.f32.mrb[0].mxu0
  %v237 = vadd.f32 0.0, %v236
  %v238 = vpop.f32.mrb[0].mxu0
  %239 = vdwg.mxu0
  %v240 = vadd.f32 %v31, %v162
  %v241 = vadd.f32 %v32, %v167
  %v242 = vadd.f32 %v33, %v172
  %v243 = vadd.f32 %v34, %v177
  %v244 = vadd.f32 %v35, %v182
  %v245 = vadd.f32 %v36, %v187
  %v246 = vadd.f32 %v37, %v192
  %v247 = vadd.f32 %v38, %v197
  %v248 = vadd.f32 %v39, %v202
  %v249 = vadd.f32 %v40, %v207
  %v250 = vadd.f32 %v41, %v212
  %v251 = vadd.f32 %v42, %v217
  %v252 = vadd.f32 %v43, %v222
  %v253 = vadd.f32 %v44, %v227
  %v254 = vadd.f32 %v45, %v232
  %v255 = vadd.f32 %v46, %v237
  %256 = vst [vmem:[#allocation2] sm:$0xff] %v240
  %257 = vst [vmem:[#allocation2 + $0x8] sm:$0xff] %v241
  %258 = vst [vmem:[#allocation2 + $0x10] sm:$0xff] %v242
  %259 = vst [vmem:[#allocation2 + $0x18] sm:$0xff] %v243
  %260 = vst [vmem:[#allocation2 + $0x20] sm:$0xff] %v244
  %261 = vst [vmem:[#allocation2 + $0x28] sm:$0xff] %v245
  %262 = vst [vmem:[#allocation2 + $0x30] sm:$0xff] %v246
  %263 = vst [vmem:[#allocation2 + $0x38] sm:$0xff] %v247
  %264 = vst [vmem:[#allocation2 + $0x40] sm:$0xff] %v248
  %265 = vst [vmem:[#allocation2 + $0x48] sm:$0xff] %v249
  %266 = vst [vmem:[#allocation2 + $0x50] sm:$0xff] %v250
  %267 = vst [vmem:[#allocation2 + $0x58] sm:$0xff] %v251
  %268 = vst [vmem:[#allocation2 + $0x60] sm:$0xff] %v252
  %269 = vst [vmem:[#allocation2 + $0x68] sm:$0xff] %v253
  %270 = vst [vmem:[#allocation2 + $0x70] sm:$0xff] %v254
  %271 = vst [vmem:[#allocation2 + $0x78] sm:$0xff] %v255
  // Predicated region
  $region14: #{global_graph_forward.3} parent=0 // pred_check
    %p272 = pneg %p11
  $region15: #{global_graph_forward.3} parent=0 // pred_check_branch
    %274 = sbr.rel (%p272) target = $region17
  $region16: #{global_graph_forward.3} parent=0 // pred_region
    %v275 = vld [vmem:[#allocation2] sm:$0xff]
    %v276 = vld [vmem:[#allocation2 + $0x8] sm:$0xff]
    %v277 = vld [vmem:[#allocation2 + $0x10] sm:$0xff]
    %v278 = vld [vmem:[#allocation2 + $0x18] sm:$0xff]
    %v279 = vld [vmem:[#allocation2 + $0x20] sm:$0xff]
    %v280 = vld [vmem:[#allocation2 + $0x28] sm:$0xff]
    %v281 = vld [vmem:[#allocation2 + $0x30] sm:$0xff]
    %v282 = vld [vmem:[#allocation2 + $0x38] sm:$0xff]
    %v283 = vld [vmem:[#allocation2 + $0x40] sm:$0xff]
    %v284 = vld [vmem:[#allocation2 + $0x48] sm:$0xff]
    %v285 = vld [vmem:[#allocation2 + $0x50] sm:$0xff]
    %v286 = vld [vmem:[#allocation2 + $0x58] sm:$0xff]
    %v287 = vld [vmem:[#allocation2 + $0x60] sm:$0xff]
    %v288 = vld [vmem:[#allocation2 + $0x68] sm:$0xff]
    %v289 = vld [vmem:[#allocation2 + $0x70] sm:$0xff]
    %v290 = vld [vmem:[#allocation2 + $0x78] sm:$0xff]
    %291 = vst [vmem:[%s2] sm:$0xff] %v275
    %292 = vst [vmem:[%s2 + $0x8] sm:$0xff] %v276
    %293 = vst [vmem:[%s2 + $0x10] sm:$0xff] %v277
    %294 = vst [vmem:[%s2 + $0x18] sm:$0xff] %v278
    %295 = vst [vmem:[%s2 + $0x20] sm:$0xff] %v279
    %296 = vst [vmem:[%s2 + $0x28] sm:$0xff] %v280
    %297 = vst [vmem:[%s2 + $0x30] sm:$0xff] %v281
    %298 = vst [vmem:[%s2 + $0x38] sm:$0xff] %v282
    %299 = vst [vmem:[%s2 + $0x40] sm:$0xff] %v283
    %300 = vst [vmem:[%s2 + $0x48] sm:$0xff] %v284
    %301 = vst [vmem:[%s2 + $0x50] sm:$0xff] %v285
    %302 = vst [vmem:[%s2 + $0x58] sm:$0xff] %v286
    %303 = vst [vmem:[%s2 + $0x60] sm:$0xff] %v287
    %304 = vst [vmem:[%s2 + $0x68] sm:$0xff] %v288
    %305 = vst [vmem:[%s2 + $0x70] sm:$0xff] %v289
    %306 = vst [vmem:[%s2 + $0x78] sm:$0xff] %v290
  $region17: #{global_graph_forward.3} parent=0 // pred_fallthru
    _
  // Predicated region
  $region18: #{global_graph_forward.3} parent=0 // pred_check
    _
  $region19: #{global_graph_forward.3} parent=0 // pred_check_branch
    %308 = sbr.rel (0) target = $region21
  $region20: #{global_graph_forward.3} parent=0 // pred_region
    _
  $region21: #{global_graph_forward.3} parent=0 // pred_fallthru
    _
  // Predicated region
  $region22: #{global_graph_forward.3} parent=0 // pred_check
    _
  $region23: #{global_graph_forward.3} parent=0 // pred_check_branch
    %310 = sbr.rel (0) target = $region25
  $region24: #{global_graph_forward.3} parent=0 // pred_region
    _
  $region25: #{global_graph_forward.3} parent=0 // pred_fallthru
    _

</llo_original>
